<compile_context>
chip_gen: v6e
topology: v6e:2x2x1
jax: 0.10.0
libtpu: 0.0.40
codegen_flags: <defaults>
</compile_context>

<pallas_src>
import functools

import jax
import jax.numpy as jnp
from jax.experimental import pallas as pl
from jax.experimental.pallas import tpu as pltpu


def _physical_vmem_bytes():
    """Per-TensorCore VMEM capacity; conservative fallback if the query fails."""
    try:
        return int(pltpu.get_tpu_info().vmem_capacity_bytes)
    except Exception:
        return 64 << 20  # v7x per-TC capacity; safe lower bound everywhere


def se_kernel(x_ref, w1t_ref, w2t_ref, cw_ref, cb_ref, o_ref, *, H, W, HW):
    # x_ref block: (Bt, C, HWp) with HWp = HW padded to a multiple of 128 and
    # padded lanes zero-filled.  w1t: (C, Cr); w2t: (Cr, C).
    # cw_ref (3,3) and cb_ref (1,1) live in SMEM (scalar reads).
    Bt, C, HWp = x_ref.shape
    x = x_ref[...]

    # ---------------- Channel attention ----------------
    # Padded lanes are zero, so summing over HWp and dividing by the true HW is
    # exactly the global average pool.  f32 accumulation, no f32 copy of x.
    y = jnp.sum(x, axis=2, dtype=jnp.float32) * (1.0 / float(HW))       # (Bt, C)
    h = jnp.maximum(
        jnp.dot(y, w1t_ref[...].astype(jnp.float32),
                preferred_element_type=jnp.float32), 0.0)               # (Bt, Cr)
    z = jnp.dot(h, w2t_ref[...].astype(jnp.float32),
                preferred_element_type=jnp.float32)                     # (Bt, C)
    s_c = jax.nn.sigmoid(z).astype(x.dtype)                             # (Bt, C)

    # ---------------- Spatial attention ----------------
    m = (jnp.mean(x, axis=1, dtype=jnp.float32)
         + jnp.max(x, axis=1).astype(jnp.float32))                      # (Bt, HWp)

    # Edge-validity masks for the 9 conv taps, built from the flat lane index.
    # Masks use the true H/W; padded output lanes are garbage but sliced off in
    # the wrapper and never feed valid lanes (wrapped/OOB taps are masked).
    lane = jax.lax.broadcasted_iota(jnp.int32, (Bt, HWp), 1)
    if (W & (W - 1)) == 0:
        col = jnp.bitwise_and(lane, W - 1)
    else:
        col = jax.lax.rem(lane, W)
    row_ok = [lane >= W, None, lane < (H - 1) * W]     # di = 0, 1, 2
    col_ok = [col >= 1, None, col <= W - 2]            # dj = 0, 1, 2

    # Hoist the 9 scalar weight reads out of the accumulation loop.
    cw = [[cw_ref[i, j] for j in range(3)] for i in range(3)]
    conv = jnp.full((Bt, HWp), cb_ref[0, 0], dtype=jnp.float32)
    for di in range(3):
        for dj in range(3):
            # cross-correlation: out[i,j] += w[di,dj] * m[i+di-1, j+dj-1]
            shift = ((1 - di) * W + (1 - dj)) % HWp
            tap = m if shift == 0 else pltpu.roll(m, shift=shift, axis=1)
            mask = row_ok[di]
            if col_ok[dj] is not None:
                mask = col_ok[dj] if mask is None else jnp.logical_and(mask, col_ok[dj])
            if mask is not None:
                tap = jnp.where(mask, tap, 0.0)
            conv = conv + cw[di][dj] * tap
    s_s = jax.nn.sigmoid(conv).astype(x.dtype)                           # (Bt, HWp)

    # out1 + out2 = x * (s_c + s_s).  s_c/s_s are cast to x.dtype first so the
    # broadcast scale is never materialized as a (Bt, C, HWp) f32 array.
    o_ref[...] = (x * (s_c[:, :, None] + s_s[:, None, :])).astype(o_ref.dtype)


def se_module(x, w1, w2, conv_w, conv_b, *, block_b=None):
    B, C, H, W = x.shape
    HW = H * W
    Cr = w1.shape[0]
    itemsize = x.dtype.itemsize

    # Lane-dense view of contiguous NCHW; pad lane axis to a multiple of 128 so
    # the dominant elementwise stores are unmasked full-lane vst's.
    HW_pad = ((HW + 127) // 128) * 128
    xf = x.reshape(B, C, HW)
    if HW_pad != HW:
        xf = jnp.pad(xf, ((0, 0), (0, 0), (0, HW_pad - HW)))
    w1t = w1.T          # (C, Cr)
    w2t = w2.T          # (Cr, C)

    # ---- generation-aware VMEM / tile budgeting ----
    phys_vmem = _physical_vmem_bytes()
    vmem_cap = int(phys_vmem * 0.8)                 # headroom for compiler scratch
    target_block_bytes = (8 << 20) if phys_vmem <= (64 << 20) else (16 << 20)

    C_pad8 = ((C + 7) // 8) * 8                     # sublane padding of (C, HWp) slab
    img_bytes = C_pad8 * HW_pad * itemsize
    # 2x in + 2x out (double-buffered) + ~2x in-kernel temporaries, plus the f32
    # spatial maps (m / tap / conv / masks) per image.
    live_per_img = 6 * img_bytes + 4 * HW_pad * 4
    slack = 4 << 20                                 # weights, iota masks, misc

    max_b_by_vmem = (vmem_cap - slack) // live_per_img
    if max_b_by_vmem < 1:
        # TODO(synk): two-pass structure (pooled-stats pass + HW-tiled apply
        # pass) for images too large to keep a (1, C, H*W) block in VMEM.
        raise ValueError(
            "SeModule Pallas kernel: a single image needs ~%d bytes of live VMEM "
            "which exceeds the budget (%d bytes)." % (live_per_img, vmem_cap - slack))

    if block_b is None:
        block_b = max(1, min(B,
                             max(1, target_block_bytes // max(img_bytes, 1)),
                             max_b_by_vmem))
        if B >= 2:
            # Keep >=2 grid steps so the 'parallel' batch axis can shard across
            # the two TensorCores on v7x and the DMA pipeline stays busy.
            block_b = min(block_b, (B + 1) // 2)
        block_b = max(1, block_b)
    grid = (pl.cdiv(B, block_b),)

    vmem_limit = int(min(vmem_cap, max(block_b * live_per_img + slack, 16 << 20)))

    kernel = functools.partial(se_kernel, H=H, W=W, HW=HW)
    out = pl.pallas_call(
        kernel,
        out_shape=jax.ShapeDtypeStruct((B, C, HW_pad), x.dtype),
        grid=grid,
        in_specs=[
            pl.BlockSpec((block_b, C, HW_pad), lambda b: (b, 0, 0)),
            pl.BlockSpec((C, Cr), lambda b: (0, 0)),
            pl.BlockSpec((Cr, C), lambda b: (0, 0)),
            pl.BlockSpec(memory_space=pltpu.MemorySpace.SMEM),   # conv weight (3,3)
            pl.BlockSpec(memory_space=pltpu.MemorySpace.SMEM),   # conv bias (1,1)
        ],
        out_specs=pl.BlockSpec((block_b, C, HW_pad), lambda b: (b, 0, 0)),
        compiler_params=pltpu.CompilerParams(
            dimension_semantics=("parallel",),
            vmem_limit_bytes=vmem_limit),
    )(xf, w1t, w2t, conv_w, conv_b)
    if HW_pad != HW:
        out = out[:, :, :HW]
    return out.reshape(B, C, H, W)


def se_module_ref(x, w1, w2, conv_w, conv_b):
    """Pure-JAX reference mirroring the PyTorch forward pass (NCHW)."""
    B, C, H, W = x.shape
    # channel attention
    y = jnp.mean(x, axis=(2, 3))                            # (B, C)
    h = jnp.maximum(y @ w1.T, 0.0)                          # (B, C//r)
    s = jax.nn.sigmoid(h @ w2.T)                            # (B, C)
    out1 = x * s[:, :, None, None]
    # spatial attention
    m = jnp.mean(x, axis=1, keepdims=True) + jnp.max(x, axis=1, keepdims=True)
    conv = jax.lax.conv_general_dilated(
        m, conv_w.reshape(1, 1, 3, 3), window_strides=(1, 1),
        padding=((1, 1), (1, 1)),
        dimension_numbers=("NCHW", "OIHW", "NCHW")) + conv_b[0, 0]
    out2 = x * jax.nn.sigmoid(conv)
    return out1 + out2


if __name__ == "__main__":
    B, C, H, W = 2, 4, 16, 16
    reduction = 4
    Cr = C // reduction

    key = jax.random.PRNGKey(0)
    k_x, k_w1, k_w2, k_cw, k_cb = jax.random.split(key, 5)

    x = jax.random.normal(k_x, (B, C, H, W), dtype=jnp.float32)
    # Deterministic synthetic parameters (shapes as in the PyTorch __init__).
    w1 = jax.random.normal(k_w1, (Cr, C), dtype=jnp.float32) * 0.5     # Linear(C, C//4, bias=False)
    w2 = jax.random.normal(k_w2, (C, Cr), dtype=jnp.float32) * 0.5     # Linear(C//4, C, bias=False)
    conv_w = jax.random.normal(k_cw, (3, 3), dtype=jnp.float32) * 0.3  # Conv2d(1,1,3) weight
    conv_b = jax.random.normal(k_cb, (1, 1), dtype=jnp.float32) * 0.1  # Conv2d(1,1,3) bias

    out = se_module(x, w1, w2, conv_w, conv_b)
    out = jax.block_until_ready(out)

    ref = jax.block_until_ready(se_module_ref(x, w1, w2, conv_w, conv_b))
    assert out.shape == (B, C, H, W)
    assert jnp.allclose(out, ref, atol=1e-4, rtol=1e-4), "mismatch vs reference"

    print("KERNEL_OK")
</pallas_src>

<mosaic_0001>
module attributes {stable_mosaic.version = 11 : i64} {
  func.func @se_kernel(%arg0: i32, %arg1: memref<1x4x256xf32, #tpu.memory_space<vmem>>, %arg2: memref<4x1xf32, #tpu.memory_space<vmem>>, %arg3: memref<1x4xf32, #tpu.memory_space<vmem>>, %arg4: memref<3x3xf32, #tpu.memory_space<smem>>, %arg5: memref<1x1xf32, #tpu.memory_space<smem>>, %arg6: memref<1x4x256xf32, #tpu.memory_space<vmem>>) attributes {dimension_semantics = [#tpu.dimension_semantics<parallel>], iteration_bounds = array<i64: 2>, scalar_prefetch = 0 : i64, scratch_operands = 0 : i64, tpu.core_type = #tpu.core_type<tc>, window_params = [{transform_indices = @transform_0, window_bounds = array<i64: 1, 4, 256>}, {pipeline_mode = #tpu.pipeline_mode<synchronous>, transform_indices = @transform_1, window_bounds = array<i64: 4, 1>}, {pipeline_mode = #tpu.pipeline_mode<synchronous>, transform_indices = @transform_2, window_bounds = array<i64: 1, 4>}, {transform_indices = @transform_3, window_bounds = array<i64: 3, 3>}, {transform_indices = @transform_4, window_bounds = array<i64: 1, 1>}, {transform_indices = @transform_5, window_bounds = array<i64: 1, 4, 256>}]} {
    %c0 = arith.constant 0 : index
    %c0_0 = arith.constant 0 : index
    %c0_1 = arith.constant 0 : index
    %0 = vector.load %arg1[%c0, %c0_0, %c0_1] : memref<1x4x256xf32, #tpu.memory_space<vmem>>, vector<1x4x256xf32>
    %cst = arith.constant dense<0.000000e+00> : vector<1x4xf32>
    %1 = vector.multi_reduction <add>, %0, %cst [2] : vector<1x4x256xf32> to vector<1x4xf32>
    %cst_2 = arith.constant 3.906250e-03 : f32
    %2 = vector.broadcast %cst_2 : f32 to vector<1x4xf32>
    %3 = arith.mulf %1, %2 : vector<1x4xf32>
    %c0_3 = arith.constant 0 : index
    %c0_4 = arith.constant 0 : index
    %4 = vector.load %arg2[%c0_3, %c0_4] : memref<4x1xf32, #tpu.memory_space<vmem>>, vector<4x1xf32>
    %cst_5 = arith.constant dense<0.000000e+00> : vector<1x1xf32>
    %5 = tpu.matmul %3, %4, %cst_5 {dimension_numbers = #tpu.dot_dimension_numbers<[1], [0], [0], [1], [0, 0, 1, 1], [], []>} : vector<1x4xf32>, vector<4x1xf32>, vector<1x1xf32> -> vector<1x1xf32>
    %cst_6 = arith.constant 0.000000e+00 : f32
    %6 = vector.broadcast %cst_6 : f32 to vector<1x1xf32>
    %7 = arith.maximumf %5, %6 : vector<1x1xf32>
    %c0_7 = arith.constant 0 : index
    %c0_8 = arith.constant 0 : index
    %8 = vector.load %arg3[%c0_7, %c0_8] : memref<1x4xf32, #tpu.memory_space<vmem>>, vector<1x4xf32>
    %cst_9 = arith.constant dense<0.000000e+00> : vector<1x4xf32>
    %9 = tpu.matmul %7, %8, %cst_9 {dimension_numbers = #tpu.dot_dimension_numbers<[1], [0], [0], [1], [0, 0, 1, 1], [], []>} : vector<1x1xf32>, vector<1x4xf32>, vector<1x4xf32> -> vector<1x4xf32>
    %10 = arith.negf %9 : vector<1x4xf32>
    %11 = math.exp %10 : vector<1x4xf32>
    %cst_10 = arith.constant 1.000000e+00 : f32
    %12 = vector.broadcast %cst_10 : f32 to vector<1x4xf32>
    %13 = arith.addf %12, %11 : vector<1x4xf32>
    %14 = arith.divf %12, %13 : vector<1x4xf32>
    %cst_11 = arith.constant dense<0.000000e+00> : vector<1x256xf32>
    %15 = vector.multi_reduction <add>, %0, %cst_11 [1] : vector<1x4x256xf32> to vector<1x256xf32>
    %cst_12 = arith.constant 4.000000e+00 : f32
    %16 = vector.broadcast %cst_12 : f32 to vector<1x256xf32>
    %17 = arith.divf %15, %16 : vector<1x256xf32>
    %cst_13 = arith.constant dense<0xFF800000> : vector<1x256xf32>
    %18 = vector.multi_reduction <maximumf>, %0, %cst_13 [1] : vector<1x4x256xf32> to vector<1x256xf32>
    %19 = arith.addf %17, %18 : vector<1x256xf32>
    %20 = tpu.iota {dimensions = array<i32: 1>} : vector<1x256xi32>
    %c15_i32 = arith.constant 15 : i32
    %21 = vector.broadcast %c15_i32 : i32 to vector<1x256xi32>
    %22 = arith.andi %20, %21 : vector<1x256xi32>
    %c16_i32 = arith.constant 16 : i32
    %23 = vector.broadcast %c16_i32 : i32 to vector<1x256xi32>
    %24 = arith.cmpi sge, %20, %23 : vector<1x256xi32>
    %c240_i32 = arith.constant 240 : i32
    %25 = vector.broadcast %c240_i32 : i32 to vector<1x256xi32>
    %26 = arith.cmpi slt, %20, %25 : vector<1x256xi32>
    %c1_i32 = arith.constant 1 : i32
    %27 = vector.broadcast %c1_i32 : i32 to vector<1x256xi32>
    %28 = arith.cmpi sge, %22, %27 : vector<1x256xi32>
    %c14_i32 = arith.constant 14 : i32
    %29 = vector.broadcast %c14_i32 : i32 to vector<1x256xi32>
    %30 = arith.cmpi sle, %22, %29 : vector<1x256xi32>
    %c0_14 = arith.constant 0 : index
    %c0_15 = arith.constant 0 : index
    %31 = memref.load %arg4[%c0_14, %c0_15] : memref<3x3xf32, #tpu.memory_space<smem>>
    %c0_16 = arith.constant 0 : index
    %c1 = arith.constant 1 : index
    %32 = memref.load %arg4[%c0_16, %c1] : memref<3x3xf32, #tpu.memory_space<smem>>
    %c0_17 = arith.constant 0 : index
    %c2 = arith.constant 2 : index
    %33 = memref.load %arg4[%c0_17, %c2] : memref<3x3xf32, #tpu.memory_space<smem>>
    %c1_18 = arith.constant 1 : index
    %c0_19 = arith.constant 0 : index
    %34 = memref.load %arg4[%c1_18, %c0_19] : memref<3x3xf32, #tpu.memory_space<smem>>
    %c1_20 = arith.constant 1 : index
    %c1_21 = arith.constant 1 : index
    %35 = memref.load %arg4[%c1_20, %c1_21] : memref<3x3xf32, #tpu.memory_space<smem>>
    %c1_22 = arith.constant 1 : index
    %c2_23 = arith.constant 2 : index
    %36 = memref.load %arg4[%c1_22, %c2_23] : memref<3x3xf32, #tpu.memory_space<smem>>
    %c2_24 = arith.constant 2 : index
    %c0_25 = arith.constant 0 : index
    %37 = memref.load %arg4[%c2_24, %c0_25] : memref<3x3xf32, #tpu.memory_space<smem>>
    %c2_26 = arith.constant 2 : index
    %c1_27 = arith.constant 1 : index
    %38 = memref.load %arg4[%c2_26, %c1_27] : memref<3x3xf32, #tpu.memory_space<smem>>
    %c2_28 = arith.constant 2 : index
    %c2_29 = arith.constant 2 : index
    %39 = memref.load %arg4[%c2_28, %c2_29] : memref<3x3xf32, #tpu.memory_space<smem>>
    %c0_30 = arith.constant 0 : index
    %c0_31 = arith.constant 0 : index
    %40 = memref.load %arg5[%c0_30, %c0_31] : memref<1x1xf32, #tpu.memory_space<smem>>
    %41 = vector.broadcast %40 : f32 to vector<1x256xf32>
    %c17_i32 = arith.constant 17 : i32
    %42 = tpu.dynamic_rotate %19 by %c17_i32 dim 1 : vector<1x256xf32>, i32 -> vector<1x256xf32>
    %43 = arith.andi %24, %28 : vector<1x256xi1>
    %cst_32 = arith.constant 0.000000e+00 : f32
    %44 = vector.broadcast %cst_32 : f32 to vector<1x256xf32>
    %45 = arith.select %43, %42, %44 : vector<1x256xi1>, vector<1x256xf32>
    %46 = vector.broadcast %31 : f32 to vector<1x256xf32>
    %47 = arith.mulf %46, %45 : vector<1x256xf32>
    %48 = arith.addf %41, %47 : vector<1x256xf32>
    %c16_i32_33 = arith.constant 16 : i32
    %49 = tpu.dynamic_rotate %19 by %c16_i32_33 dim 1 : vector<1x256xf32>, i32 -> vector<1x256xf32>
    %cst_34 = arith.constant 0.000000e+00 : f32
    %50 = vector.broadcast %cst_34 : f32 to vector<1x256xf32>
    %51 = arith.select %24, %49, %50 : vector<1x256xi1>, vector<1x256xf32>
    %52 = vector.broadcast %32 : f32 to vector<1x256xf32>
    %53 = arith.mulf %52, %51 : vector<1x256xf32>
    %54 = arith.addf %48, %53 : vector<1x256xf32>
    %c15_i32_35 = arith.constant 15 : i32
    %55 = tpu.dynamic_rotate %19 by %c15_i32_35 dim 1 : vector<1x256xf32>, i32 -> vector<1x256xf32>
    %56 = arith.andi %24, %30 : vector<1x256xi1>
    %cst_36 = arith.constant 0.000000e+00 : f32
    %57 = vector.broadcast %cst_36 : f32 to vector<1x256xf32>
    %58 = arith.select %56, %55, %57 : vector<1x256xi1>, vector<1x256xf32>
    %59 = vector.broadcast %33 : f32 to vector<1x256xf32>
    %60 = arith.mulf %59, %58 : vector<1x256xf32>
    %61 = arith.addf %54, %60 : vector<1x256xf32>
    %c1_i32_37 = arith.constant 1 : i32
    %62 = tpu.dynamic_rotate %19 by %c1_i32_37 dim 1 : vector<1x256xf32>, i32 -> vector<1x256xf32>
    %cst_38 = arith.constant 0.000000e+00 : f32
    %63 = vector.broadcast %cst_38 : f32 to vector<1x256xf32>
    %64 = arith.select %28, %62, %63 : vector<1x256xi1>, vector<1x256xf32>
    %65 = vector.broadcast %34 : f32 to vector<1x256xf32>
    %66 = arith.mulf %65, %64 : vector<1x256xf32>
    %67 = arith.addf %61, %66 : vector<1x256xf32>
    %68 = vector.broadcast %35 : f32 to vector<1x256xf32>
    %69 = arith.mulf %68, %19 : vector<1x256xf32>
    %70 = arith.addf %67, %69 : vector<1x256xf32>
    %c255_i32 = arith.constant 255 : i32
    %71 = tpu.dynamic_rotate %19 by %c255_i32 dim 1 : vector<1x256xf32>, i32 -> vector<1x256xf32>
    %cst_39 = arith.constant 0.000000e+00 : f32
    %72 = vector.broadcast %cst_39 : f32 to vector<1x256xf32>
    %73 = arith.select %30, %71, %72 : vector<1x256xi1>, vector<1x256xf32>
    %74 = vector.broadcast %36 : f32 to vector<1x256xf32>
    %75 = arith.mulf %74, %73 : vector<1x256xf32>
    %76 = arith.addf %70, %75 : vector<1x256xf32>
    %c241_i32 = arith.constant 241 : i32
    %77 = tpu.dynamic_rotate %19 by %c241_i32 dim 1 : vector<1x256xf32>, i32 -> vector<1x256xf32>
    %78 = arith.andi %26, %28 : vector<1x256xi1>
    %cst_40 = arith.constant 0.000000e+00 : f32
    %79 = vector.broadcast %cst_40 : f32 to vector<1x256xf32>
    %80 = arith.select %78, %77, %79 : vector<1x256xi1>, vector<1x256xf32>
    %81 = vector.broadcast %37 : f32 to vector<1x256xf32>
    %82 = arith.mulf %81, %80 : vector<1x256xf32>
    %83 = arith.addf %76, %82 : vector<1x256xf32>
    %c240_i32_41 = arith.constant 240 : i32
    %84 = tpu.dynamic_rotate %19 by %c240_i32_41 dim 1 : vector<1x256xf32>, i32 -> vector<1x256xf32>
    %cst_42 = arith.constant 0.000000e+00 : f32
    %85 = vector.broadcast %cst_42 : f32 to vector<1x256xf32>
    %86 = arith.select %26, %84, %85 : vector<1x256xi1>, vector<1x256xf32>
    %87 = vector.broadcast %38 : f32 to vector<1x256xf32>
    %88 = arith.mulf %87, %86 : vector<1x256xf32>
    %89 = arith.addf %83, %88 : vector<1x256xf32>
    %c239_i32 = arith.constant 239 : i32
    %90 = tpu.dynamic_rotate %19 by %c239_i32 dim 1 : vector<1x256xf32>, i32 -> vector<1x256xf32>
    %91 = arith.andi %26, %30 : vector<1x256xi1>
    %cst_43 = arith.constant 0.000000e+00 : f32
    %92 = vector.broadcast %cst_43 : f32 to vector<1x256xf32>
    %93 = arith.select %91, %90, %92 : vector<1x256xi1>, vector<1x256xf32>
    %94 = vector.broadcast %39 : f32 to vector<1x256xf32>
    %95 = arith.mulf %94, %93 : vector<1x256xf32>
    %96 = arith.addf %89, %95 : vector<1x256xf32>
    %97 = arith.negf %96 : vector<1x256xf32>
    %98 = math.exp %97 : vector<1x256xf32>
    %cst_44 = arith.constant 1.000000e+00 : f32
    %99 = vector.broadcast %cst_44 : f32 to vector<1x256xf32>
    %100 = arith.addf %99, %98 : vector<1x256xf32>
    %101 = arith.divf %99, %100 : vector<1x256xf32>
    %102 = vector.shape_cast %14 : vector<1x4xf32> to vector<1x4x1xf32>
    %103 = vector.shape_cast %101 : vector<1x256xf32> to vector<1x1x256xf32>
    %104 = vector.broadcast %102 : vector<1x4x1xf32> to vector<1x4x256xf32>
    %105 = vector.broadcast %103 : vector<1x1x256xf32> to vector<1x4x256xf32>
    %106 = arith.addf %104, %105 : vector<1x4x256xf32>
    %107 = arith.mulf %0, %106 : vector<1x4x256xf32>
    %c0_45 = arith.constant 0 : index
    %c0_46 = arith.constant 0 : index
    %c0_47 = arith.constant 0 : index
    %108 = vector.load %arg6[%c0_45, %c0_46, %c0_47] : memref<1x4x256xf32, #tpu.memory_space<vmem>>, vector<1x4x256xf32>
    tpu.vector_store %arg6[%c0_45, %c0_46, %c0_47], %107 {strides = array<i32>} : memref<1x4x256xf32, #tpu.memory_space<vmem>>, vector<1x4x256xf32>,
    return
  }
  func.func @transform_0(%arg0: i32) -> (i32, i32, i32) {
    %c0_i32 = arith.constant 0 : i32
    %c0_i32_0 = arith.constant 0 : i32
    %c0_i32_1 = arith.constant 0 : i32
    return %arg0, %c0_i32, %c0_i32_0 : i32, i32, i32
  }
  func.func @transform_1(%arg0: i32) -> (i32, i32) {
    %c0_i32 = arith.constant 0 : i32
    %c0_i32_0 = arith.constant 0 : i32
    %c0_i32_1 = arith.constant 0 : i32
    return %c0_i32, %c0_i32_0 : i32, i32
  }
  func.func @transform_2(%arg0: i32) -> (i32, i32) {
    %c0_i32 = arith.constant 0 : i32
    %c0_i32_0 = arith.constant 0 : i32
    %c0_i32_1 = arith.constant 0 : i32
    return %c0_i32, %c0_i32_0 : i32, i32
  }
  func.func @transform_3(%arg0: i32) -> (i32, i32) {
    %c0_i32 = arith.constant 0 : i32
    %c0_i32_0 = arith.constant 0 : i32
    %c0_i32_1 = arith.constant 0 : i32
    return %c0_i32, %c0_i32_0 : i32, i32
  }
  func.func @transform_4(%arg0: i32) -> (i32, i32) {
    %c0_i32 = arith.constant 0 : i32
    %c0_i32_0 = arith.constant 0 : i32
    %c0_i32_1 = arith.constant 0 : i32
    return %c0_i32, %c0_i32_0 : i32, i32
  }
  func.func @transform_5(%arg0: i32) -> (i32, i32, i32) {
    %c0_i32 = arith.constant 0 : i32
    %c0_i32_0 = arith.constant 0 : i32
    %c0_i32_1 = arith.constant 0 : i32
    return %arg0, %c0_i32, %c0_i32_0 : i32, i32, i32
  }
}

</mosaic_0001>

<llo_original>
// kernel: tpu_custom_call.1
$region0: #{tpu_custom_call.1}
  #allocation0 [shape = 'u32[]', space=smem, size = 0x4, offset = 0x4, fixed_abs, tag = 'smem constant byte address 0x4 - core index']
  #allocation1 [shape = 'u32[144,128]{1,0:T(1,128)}', space=vmem, size = 0x12000, scoped, tag = 'internal scratch']
  #allocation2 [shape = 'f32[1,1]{1,0:T(1,128)S(6)}', space=smem, size = 0x200, scoped, tag = 'scoped memory for tpu_custom_call.1']
  %s0 = inlined_call_operand.hbm [shape: f32[2,4,256], index: 0, kind: input, shape index: {}]
  %s1 = inlined_call_operand.vmem [shape: f32[4,1], index: 1, kind: input, shape index: {}]
  %s2 = inlined_call_operand.vmem [shape: f32[1,4], index: 2, kind: input, shape index: {}]
  %s3 = inlined_call_operand.vmem [shape: f32[3,3], index: 3, kind: input, shape index: {}]
  %s4 = inlined_call_operand.<no memory space> [shape: f32[1,1], index: 4, kind: input, shape index: {}]
  %s5 = inlined_call_operand.hbm [shape: f32[2,4,256], index: 5, kind: output, shape index: {}]
  %s6 = sld [smem:[#allocation0]]
  $region61: #{tpu_custom_call.1} parent=0
    _
  %s8 = ssub.s32 1, %s6
  %s9 = scalar_select 0, %s8, %s6
  %10 = sst [smem:[#allocation2]] %s4
  $region1: #{tpu_custom_call.1} parent=0
    #allocation3 [shape = 'u8[8192]{0}', space=vmem, size = 0x2000, scoped, tag = 'input window, operand 0']
    #allocation4 [shape = 's32[2]{0}', space=sflag, size = 0x8, scoped, tag = 'scoped memory for tpu_custom_call.1']
    #allocation5 [shape = 's32[2]{0}', space=sflag, size = 0x8, scoped, tag = 'scoped memory for tpu_custom_call.1']
    #allocation6 [shape = 's32[2]{0}', space=sflag, size = 0x8, scoped, tag = 'scoped memory for tpu_custom_call.1']
    #allocation7 [shape = 'u8[2048]{0}', space=smem, size = 0x800, scoped, tag = 'input window, operand 3, single buffered']
    #allocation8 [shape = 'u8[8192]{0}', space=vmem, size = 0x2000, scoped, tag = 'output window, operand 0']
    %11 = vsyncpa [#allocation4], 0
    %s12 = scalar_lea.sflag [#allocation4], 1
    %13 = vsyncpa %s12, 0
    %14 = vsyncpa [#allocation6], 0
    %15 = vsyncpa [#allocation5], 0
    %s16 = scalar_lea.sflag [#allocation5], 1
    %17 = vsyncpa %s16, 0
    loop: start=0, step=1, limit=4
    $region2: #{tpu_custom_call.1} parent=1 // loop_pre_header
      _
    $region3: #{tpu_custom_call.1} parent=1 // loop_header
      %s19 = sphi 0, %s23
      %p20 = scmp.ge.s32.totalorder %s19, 4
      %s29 = sphi 0, %s31
      %s32 = sphi 0, %s29
      %s33 = sphi 0, %s32
      %s49 = sphi 0, %s33
      %s53 = sphi 0, %s53
      %s55 = sphi 0, %s53
      %s56 = sphi 0, %s55
      %s70 = sphi 0, %s56
      %s74 = sphi 0, %s74
      %s76 = sphi 0, %s74
      %s77 = sphi 0, %s76
      %s91 = sphi 0, %s77
      %s95 = sphi 0, %s95
      %s97 = sphi 0, %s95
      %s98 = sphi 0, %s97
      %s112 = sphi 0, %s98
      %s116 = sphi 0, %s116
      %s118 = sphi 0, %s116
      %s119 = sphi 0, %s118
      %s133 = sphi 0, %s119
      %s139 = sphi 0, %s141
      %s142 = sphi 0, %s139
      %s143 = sphi 0, %s142
      %s159 = sphi 0, %s143
    $region4: #{tpu_custom_call.1} parent=1 // loop_header_branch
      %22 = sbr.rel (%p20) target = $region8
    $region5: #{tpu_custom_call.1} parent=1 // loop_body
      %s24 = ssub.s32 %s19, 1
      %s25 = ssub.s32 %s19, 2
      %s26 = sadd.s32 %s19, 1
      %s27 = ssub.s32 %s19, %s26
      %p28 = scmp.eq.s32.totalorder %s27, 0
      %s30 = sadd.s32 %s29, 1
      %s31 = scalar_select %p28, %s29, %s30
      %p34 = pneg %p28
      %p35 = scmp.eq.s32.totalorder %s19, 1
      %p36 = por %p34, %p35
      %p37 = scmp.ne.s32.totalorder %s29, %s32
      %p38 = scmp.eq.s32.totalorder %s19, 0
      %p39 = por %p37, %p38
      %p40 = scmp.ne.s32.totalorder %s29, %s32
      %p41 = scmp.eq.s32.totalorder %s24, 1
      %p42 = por %p40, %p41
      %p43 = scmp.ne.s32.totalorder %s32, %s33
      %p44 = scmp.eq.s32.totalorder %s24, 0
      %p45 = por %p43, %p44
      %p46 = scmp.ne.s32.totalorder %s32, %s33
      %p47 = scmp.eq.s32.totalorder %s25, 1
      %p48 = por %p46, %p47
      %p50 = scmp.ne.s32.totalorder %s33, %s49
      %p51 = scmp.eq.s32.totalorder %s25, 0
      %p52 = por %p50, %p51
      %s54 = sadd.s32 %s53, 1
      %p57 = scmp.eq.s32.totalorder %s19, 1
      %p58 = scmp.ne.s32.totalorder %s53, %s55
      %p59 = scmp.eq.s32.totalorder %s19, 0
      %p60 = por %p58, %p59
      %p61 = scmp.ne.s32.totalorder %s53, %s55
      %p62 = scmp.eq.s32.totalorder %s24, 1
      %p63 = por %p61, %p62
      %p64 = scmp.ne.s32.totalorder %s55, %s56
      %p65 = scmp.eq.s32.totalorder %s24, 0
      %p66 = por %p64, %p65
      %p67 = scmp.ne.s32.totalorder %s55, %s56
      %p68 = scmp.eq.s32.totalorder %s25, 1
      %p69 = por %p67, %p68
      %p71 = scmp.ne.s32.totalorder %s56, %s70
      %p72 = scmp.eq.s32.totalorder %s25, 0
      %p73 = por %p71, %p72
      %s75 = sadd.s32 %s74, 1
      %p78 = scmp.eq.s32.totalorder %s19, 1
      %p79 = scmp.ne.s32.totalorder %s74, %s76
      %p80 = scmp.eq.s32.totalorder %s19, 0
      %p81 = por %p79, %p80
      %p82 = scmp.ne.s32.totalorder %s74, %s76
      %p83 = scmp.eq.s32.totalorder %s24, 1
      %p84 = por %p82, %p83
      %p85 = scmp.ne.s32.totalorder %s76, %s77
      %p86 = scmp.eq.s32.totalorder %s24, 0
      %p87 = por %p85, %p86
      %p88 = scmp.ne.s32.totalorder %s76, %s77
      %p89 = scmp.eq.s32.totalorder %s25, 1
      %p90 = por %p88, %p89
      %p92 = scmp.ne.s32.totalorder %s77, %s91
      %p93 = scmp.eq.s32.totalorder %s25, 0
      %p94 = por %p92, %p93
      %s96 = sadd.s32 %s95, 1
      %p99 = scmp.eq.s32.totalorder %s19, 1
      %p100 = scmp.ne.s32.totalorder %s95, %s97
      %p101 = scmp.eq.s32.totalorder %s19, 0
      %p102 = por %p100, %p101
      %p103 = scmp.ne.s32.totalorder %s95, %s97
      %p104 = scmp.eq.s32.totalorder %s24, 1
      %p105 = por %p103, %p104
      %p106 = scmp.ne.s32.totalorder %s97, %s98
      %p107 = scmp.eq.s32.totalorder %s24, 0
      %p108 = por %p106, %p107
      %p109 = scmp.ne.s32.totalorder %s97, %s98
      %p110 = scmp.eq.s32.totalorder %s25, 1
      %p111 = por %p109, %p110
      %p113 = scmp.ne.s32.totalorder %s98, %s112
      %p114 = scmp.eq.s32.totalorder %s25, 0
      %p115 = por %p113, %p114
      %s117 = sadd.s32 %s116, 1
      %p120 = scmp.eq.s32.totalorder %s19, 1
      %p121 = scmp.ne.s32.totalorder %s116, %s118
      %p122 = scmp.eq.s32.totalorder %s19, 0
      %p123 = por %p121, %p122
      %p124 = scmp.ne.s32.totalorder %s116, %s118
      %p125 = scmp.eq.s32.totalorder %s24, 1
      %p126 = por %p124, %p125
      %p127 = scmp.ne.s32.totalorder %s118, %s119
      %p128 = scmp.eq.s32.totalorder %s24, 0
      %p129 = por %p127, %p128
      %p130 = scmp.ne.s32.totalorder %s118, %s119
      %p131 = scmp.eq.s32.totalorder %s25, 1
      %p132 = por %p130, %p131
      %p134 = scmp.ne.s32.totalorder %s119, %s133
      %p135 = scmp.eq.s32.totalorder %s25, 0
      %p136 = por %p134, %p135
      %s137 = ssub.s32 %s19, %s26
      %p138 = scmp.eq.s32.totalorder %s137, 0
      %s140 = sadd.s32 %s139, 1
      %s141 = scalar_select %p138, %s139, %s140
      %p144 = pneg %p138
      %p145 = scmp.eq.s32.totalorder %s19, 1
      %p146 = por %p144, %p145
      %p147 = scmp.ne.s32.totalorder %s139, %s142
      %p148 = scmp.eq.s32.totalorder %s19, 0
      %p149 = por %p147, %p148
      %p150 = scmp.ne.s32.totalorder %s139, %s142
      %p151 = scmp.eq.s32.totalorder %s24, 1
      %p152 = por %p150, %p151
      %p153 = scmp.ne.s32.totalorder %s142, %s143
      %p154 = scmp.eq.s32.totalorder %s24, 0
      %p155 = por %p153, %p154
      %p156 = scmp.ne.s32.totalorder %s142, %s143
      %p157 = scmp.eq.s32.totalorder %s25, 1
      %p158 = por %p156, %p157
      %p160 = scmp.ne.s32.totalorder %s143, %s159
      %p161 = scmp.eq.s32.totalorder %s25, 0
      %p162 = por %p160, %p161
      %p163 = scmp.le.s32.totalorder 1, %s19
      %p164 = scmp.lt.s32.totalorder %s19, 3
      %p165 = pnand %p163, %p164
      %p166 = pneg %p165
      // Predicated region
      $region9: #{tpu_custom_call.1} parent=5 // pred_check
        _
      $region10: #{tpu_custom_call.1} parent=5 // pred_check_branch
        %168 = sbr.rel (%p165) target = $region12
      $region11: #{tpu_custom_call.1} parent=5 // pred_region
        %s169 = ssub.s32 %s19, 1
        // Predicated region
        $region13: #{tpu_custom_call.1} parent=11 // pred_check
          %p170 = pneg %p66
        $region14: #{tpu_custom_call.1} parent=11 // pred_check_branch
          %172 = sbr.rel (%p170) target = $region16
        $region15: #{tpu_custom_call.1} parent=11 // pred_region
          _
        $region16: #{tpu_custom_call.1} parent=11 // pred_fallthru
          _
        // Predicated region
        $region17: #{tpu_custom_call.1} parent=11 // pred_check
          %p173 = pneg %p87
        $region18: #{tpu_custom_call.1} parent=11 // pred_check_branch
          %175 = sbr.rel (%p173) target = $region20
        $region19: #{tpu_custom_call.1} parent=11 // pred_region
          _
        $region20: #{tpu_custom_call.1} parent=11 // pred_fallthru
          _
        // Predicated region
        $region21: #{tpu_custom_call.1} parent=11 // pred_check
          %p176 = pneg %p108
        $region22: #{tpu_custom_call.1} parent=11 // pred_check_branch
          %178 = sbr.rel (%p176) target = $region24
        $region23: #{tpu_custom_call.1} parent=11 // pred_region
          %s180 = ssub.s32 64, 64
          %181 = vsyncadd [#allocation6], %s180
          %s183 = sshll.u32 %s3, 4
          %s184 = int_to_ptr.vmem [resolvable:$true] %s183
          %186 = dma.vmem_to_smem %s184, 64, [#allocation7], [#allocation6]
        $region24: #{tpu_custom_call.1} parent=11 // pred_fallthru
          _
        // Predicated region
        $region25: #{tpu_custom_call.1} parent=11 // pred_check
          %p187 = pneg %p129
        $region26: #{tpu_custom_call.1} parent=11 // pred_check_branch
          %189 = sbr.rel (%p187) target = $region28
        $region27: #{tpu_custom_call.1} parent=11 // pred_region
          _
        $region28: #{tpu_custom_call.1} parent=11 // pred_fallthru
          _
      $region12: #{tpu_custom_call.1} parent=5 // pred_fallthru
        _
      %p190 = scmp.lt.s32.totalorder %s19, 2
      // Predicated region
      $region29: #{tpu_custom_call.1} parent=5 // pred_check
        %p191 = pneg %p190
      $region30: #{tpu_custom_call.1} parent=5 // pred_check_branch
        %193 = sbr.rel (%p191) target = $region32
      $region31: #{tpu_custom_call.1} parent=5 // pred_region
        // Predicated region
        $region33: #{tpu_custom_call.1} parent=31 // pred_check
          %p194 = pneg %p39
        $region34: #{tpu_custom_call.1} parent=31 // pred_check_branch
          %196 = sbr.rel (%p194) target = $region36
        $region35: #{tpu_custom_call.1} parent=31 // pred_region
          %s197 = sand.u32 %s29, 1
          %s198 = scalar_lea.sflag [#allocation4], %s197
          %s199 = sand.u32 %s29, 1
          %s200 = smul.addr %s199, 8
          %s201 = scalar_lea.vmem [#allocation3], %s200
          %s203 = ssub.s32 128, 128
          %204 = vsyncadd %s198, %s203
          %s205 = smul.addr %s19, 2
          %s206 = smul.addr %s205, 64
          %s207 = scalar_lea.hbm %s0, %s206
          %s209 = sshll.u32 %s201, 4
          %s210 = int_to_ptr.vmem [resolvable:$true] %s209
          %212 = dma.hbm_to_vmem [thread:$0]  %s207, 128, %s210, %s198
        $region36: #{tpu_custom_call.1} parent=31 // pred_fallthru
          _
      $region32: #{tpu_custom_call.1} parent=5 // pred_fallthru
        _
      %p213 = scmp.le.s32.totalorder 1, %s19
      %p214 = scmp.lt.s32.totalorder %s19, 3
      %p215 = pnand %p213, %p214
      %p216 = pneg %p215
      // Predicated region
      $region37: #{tpu_custom_call.1} parent=5 // pred_check
        _
      $region38: #{tpu_custom_call.1} parent=5 // pred_check_branch
        %218 = sbr.rel (%p215) target = $region40
      $region39: #{tpu_custom_call.1} parent=5 // pred_region
        %s219 = ssub.s32 %s19, 1
        %s220 = sand.u32 %s32, 1
        %s221 = scalar_lea.sflag [#allocation4], %s220
        %s222 = sand.u32 %s32, 1
        %s223 = smul.addr %s222, 8
        %s224 = scalar_lea.vmem [#allocation3], %s223
        // Predicated region
        $region41: #{tpu_custom_call.1} parent=39 // pred_check
          %p225 = pneg %p45
        $region42: #{tpu_custom_call.1} parent=39 // pred_check_branch
          %227 = sbr.rel (%p225) target = $region44
        $region43: #{tpu_custom_call.1} parent=39 // pred_region
          %228 = dma.done %s221, 128
        $region44: #{tpu_custom_call.1} parent=39 // pred_fallthru
          _
        // Predicated region
        $region45: #{tpu_custom_call.1} parent=39 // pred_check
          %p229 = pneg %p108
        $region46: #{tpu_custom_call.1} parent=39 // pred_check_branch
          %231 = sbr.rel (%p229) target = $region48
        $region47: #{tpu_custom_call.1} parent=39 // pred_region
          %232 = dma.done [#allocation6], 64
        $region48: #{tpu_custom_call.1} parent=39 // pred_fallthru
          _
        %233 = sfence
        %s234 = sand.u32 %s32, 1
        %s235 = scalar_lea.sflag [#allocation4], %s234
        %s236 = sand.u32 %s32, 1
        %s237 = smul.addr %s236, 8
        %s238 = scalar_lea.vmem [#allocation3], %s237
        %p239 = pneg %p45
        %p240 = pneg %p42
        %p241 = pneg %p66
        %p242 = pneg %p63
        %p243 = pneg %p87
        %p244 = pneg %p84
        %p245 = pneg %p108
        %p246 = pneg %p105
        %p247 = pneg %p129
        %p248 = pneg %p126
        %p249 = pneg %p155
        %p250 = pneg %p152
        %s251 = sand.u32 %s142, 1
        %s252 = scalar_lea.sflag [#allocation5], %s251
        %s253 = sand.u32 %s142, 1
        %s254 = smul.addr %s253, 8
        %s255 = scalar_lea.vmem [#allocation8], %s254
        %v256 = vld [vmem:[%s224] sm:$0xff]
        %v258 = vcombine.high %v256, %v256
        %vm260 = vcmask 1043456
        %v261 = vsel %vm260, %v256, 0.0
        %v262 = vsel %vm260, %v258, 0.0
        %v263 = vadd.f32 %v261, %v262
        %264 = vadd.xlane.f32.xlu0 %v263
        %v265 = vpop.xlane.xlu0 %264
        %v266 = vmul.f32 %v265, 0.00390625
        %v267 = vld [vmem:[%s1] sm:$0xf]
        %v269 = vlaneseq
        %v270 = vand.u32 %v269, 127
        %v271 = vlaneseq
        %v272 = vshrl.u32 %v271, 7
        %v273 = vsub.s32 %v270, %v272
        %v274 = vrot.slane %v266, %v273
        %vm275 = vcmask 31744
        %v276 = vsel %vm275, %v274, 0
        %v279 = vsel %vm260, %v267, 0
        %281 = vmatprep.subr.mxu0 0.0
        %282 = vmatpush1.msra.mxu0 0.0
        %283 = vmatprep.subr.mxu0 0.0
        %284 = vmatpush1.msra.mxu0 0.0
        %285 = vmatprep.subr.mxu0 0.0
        %286 = vmatpush1.msra.mxu0 0.0
        %287 = vmatprep.subr.mxu0 0.0
        %288 = vmatpush1.msra.mxu0 0.0
        %289 = vmatprep.subr.mxu0 0.0
        %290 = vmatpush1.msra.mxu0 0.0
        %291 = vmatprep.subr.mxu0 0.0
        %292 = vmatpush1.msra.mxu0 0.0
        %293 = vmatprep.subr.mxu0 0.0
        %294 = vmatpush1.msra.mxu0 0.0
        %295 = vmatprep.subr.mxu0 0.0
        %296 = vmatpush1.msra.mxu0 0.0
        %297 = vmatprep.subr.mxu0 0.0
        %298 = vmatpush1.msra.mxu0 0.0
        %299 = vmatprep.subr.mxu0 0.0
        %300 = vmatpush1.msra.mxu0 0.0
        %301 = vmatprep.subr.mxu0 0.0
        %302 = vmatpush1.msra.mxu0 0.0
        %303 = vmatprep.subr.mxu0 0.0
        %304 = vmatpush1.msra.mxu0 0.0
        %305 = vmatprep.subr.mxu0 0.0
        %306 = vmatpush1.msra.mxu0 0.0
        %307 = vmatprep.subr.mxu0 0.0
        %308 = vmatpush1.msra.mxu0 0.0
        %309 = vmatprep.subr.mxu0 0.0
        %310 = vmatpush1.msra.mxu0 0.0
        %311 = vmatprep.subr.mxu0 0.0
        %312 = vmatpush1.msra.mxu0 %v279
        %313 = vmatprep.subr.mxu0 0.0
        %314 = vmatpush2.msra.mxu0 0.0
        %315 = vmatprep.subr.mxu0 0.0
        %316 = vmatpush2.msra.mxu0 0.0
        %317 = vmatprep.subr.mxu0 0.0
        %318 = vmatpush2.msra.mxu0 0.0
        %319 = vmatprep.subr.mxu0 0.0
        %320 = vmatpush2.msra.mxu0 0.0
        %321 = vmatprep.subr.mxu0 0.0
        %322 = vmatpush2.msra.mxu0 0.0
        %323 = vmatprep.subr.mxu0 0.0
        %324 = vmatpush2.msra.mxu0 0.0
        %325 = vmatprep.subr.mxu0 0.0
        %326 = vmatpush2.msra.mxu0 0.0
        %327 = vmatprep.subr.mxu0 0.0
        %328 = vmatpush2.msra.mxu0 0.0
        %329 = vmatprep.subr.mxu0 0.0
        %330 = vmatpush2.msra.mxu0 0.0
        %331 = vmatprep.subr.mxu0 0.0
        %332 = vmatpush2.msra.mxu0 0.0
        %333 = vmatprep.subr.mxu0 0.0
        %334 = vmatpush2.msra.mxu0 0.0
        %335 = vmatprep.subr.mxu0 0.0
        %336 = vmatpush2.msra.mxu0 0.0
        %337 = vmatprep.subr.mxu0 0.0
        %338 = vmatpush2.msra.mxu0 0.0
        %339 = vmatprep.subr.mxu0 0.0
        %340 = vmatpush2.msra.mxu0 0.0
        %341 = vmatprep.subr.mxu0 0.0
        %342 = vmatpush2.msra.mxu0 0.0
        %343 = vmatprep.subr.mxu0 0.0
        %344 = vmatpush2.msra.mxu0 0.0
        %345 = vmatprep.mubr.f32.mxu0 0.0
        %346 = vmatmul.mubr.f32.gmra.mxu0 %v276
        %v347 = vpop.f32.mrf.mxu0
        %v348 = vadd.f32 0.0, %v347
        %v349 = vpop.f32.mrf.mxu0
        %350 = vdwg.mxu0
        %v351 = vmax.f32 %v348, 0.0
        %v352 = vld [vmem:[%s2] sm:$0x1]
        %vm353 = vcmask 7168
        %v355 = vsel %vm353, %v351, 0
        %vm357 = vcmask 1040384
        %v359 = vsel %vm357, %v352, 0
        %361 = vmatprep.subr.mxu0 0.0
        %362 = vmatpush1.msra.mxu0 0.0
        %363 = vmatprep.subr.mxu0 0.0
        %364 = vmatpush1.msra.mxu0 0.0
        %365 = vmatprep.subr.mxu0 0.0
        %366 = vmatpush1.msra.mxu0 0.0
        %367 = vmatprep.subr.mxu0 0.0
        %368 = vmatpush1.msra.mxu0 0.0
        %369 = vmatprep.subr.mxu0 0.0
        %370 = vmatpush1.msra.mxu0 0.0
        %371 = vmatprep.subr.mxu0 0.0
        %372 = vmatpush1.msra.mxu0 0.0
        %373 = vmatprep.subr.mxu0 0.0
        %374 = vmatpush1.msra.mxu0 0.0
        %375 = vmatprep.subr.mxu0 0.0
        %376 = vmatpush1.msra.mxu0 0.0
        %377 = vmatprep.subr.mxu0 0.0
        %378 = vmatpush1.msra.mxu0 0.0
        %379 = vmatprep.subr.mxu0 0.0
        %380 = vmatpush1.msra.mxu0 0.0
        %381 = vmatprep.subr.mxu0 0.0
        %382 = vmatpush1.msra.mxu0 0.0
        %383 = vmatprep.subr.mxu0 0.0
        %384 = vmatpush1.msra.mxu0 0.0
        %385 = vmatprep.subr.mxu0 0.0
        %386 = vmatpush1.msra.mxu0 0.0
        %387 = vmatprep.subr.mxu0 0.0
        %388 = vmatpush1.msra.mxu0 0.0
        %389 = vmatprep.subr.mxu0 0.0
        %390 = vmatpush1.msra.mxu0 0.0
        %391 = vmatprep.subr.mxu0 0.0
        %392 = vmatpush1.msra.mxu0 %v359
        %393 = vmatprep.subr.mxu0 0.0
        %394 = vmatpush2.msra.mxu0 0.0
        %395 = vmatprep.subr.mxu0 0.0
        %396 = vmatpush2.msra.mxu0 0.0
        %397 = vmatprep.subr.mxu0 0.0
        %398 = vmatpush2.msra.mxu0 0.0
        %399 = vmatprep.subr.mxu0 0.0
        %400 = vmatpush2.msra.mxu0 0.0
        %401 = vmatprep.subr.mxu0 0.0
        %402 = vmatpush2.msra.mxu0 0.0
        %403 = vmatprep.subr.mxu0 0.0
        %404 = vmatpush2.msra.mxu0 0.0
        %405 = vmatprep.subr.mxu0 0.0
        %406 = vmatpush2.msra.mxu0 0.0
        %407 = vmatprep.subr.mxu0 0.0
        %408 = vmatpush2.msra.mxu0 0.0
        %409 = vmatprep.subr.mxu0 0.0
        %410 = vmatpush2.msra.mxu0 0.0
        %411 = vmatprep.subr.mxu0 0.0
        %412 = vmatpush2.msra.mxu0 0.0
        %413 = vmatprep.subr.mxu0 0.0
        %414 = vmatpush2.msra.mxu0 0.0
        %415 = vmatprep.subr.mxu0 0.0
        %416 = vmatpush2.msra.mxu0 0.0
        %417 = vmatprep.subr.mxu0 0.0
        %418 = vmatpush2.msra.mxu0 0.0
        %419 = vmatprep.subr.mxu0 0.0
        %420 = vmatpush2.msra.mxu0 0.0
        %421 = vmatprep.subr.mxu0 0.0
        %422 = vmatpush2.msra.mxu0 0.0
        %423 = vmatprep.subr.mxu0 0.0
        %424 = vmatpush2.msra.mxu0 0.0
        %425 = vmatprep.mubr.f32.mxu0 0.0
        %426 = vmatmul.mubr.f32.gmra.mxu0 %v355
        %v427 = vpop.f32.mrf.mxu0
        %v428 = vadd.f32 0.0, %v427
        %v429 = vpop.f32.mrf.mxu0
        %430 = vdwg.mxu0
        %v431 = vxor.u32 %v428, 2147483648
        %v432 = vmul.f32 %v431, 1.442695
        %v433 = vpow.pop %v432
        %v434 = vadd.f32 %v433, 1.0
        %v435 = vrcp.pop %v434
        %v436 = vmul.f32 1.0, %v435
        %v437 = vrot.slane %v261, 4
        %v438 = vadd.f32 %v261, %v437
        %v439 = vrot.slane %v438, 2
        %v440 = vadd.f32 %v438, %v439
        %v441 = vrot.slane %v440, 1
        %v442 = vadd.f32 %v440, %v441
        %v443 = vrot.slane %v262, 4
        %v444 = vadd.f32 %v262, %v443
        %v445 = vrot.slane %v444, 2
        %v446 = vadd.f32 %v444, %v445
        %v447 = vrot.slane %v446, 1
        %v448 = vadd.f32 %v446, %v447
        %v449 = vrcp.pop 4.0
        %v450 = vmul.f32 %v442, %v449
        %v451 = vmul.f32 %v448, %v449
        %v452 = vsel %vm260, %v256, -inf
        %v453 = vrot.slane %v452, 4
        %v454 = vmax.f32 %v452, %v453
        %v455 = vrot.slane %v454, 2
        %v456 = vmax.f32 %v454, %v455
        %v457 = vrot.slane %v456, 1
        %v458 = vmax.f32 %v456, %v457
        %v459 = vsel %vm260, %v258, -inf
        %v460 = vrot.slane %v459, 4
        %v461 = vmax.f32 %v459, %v460
        %v462 = vrot.slane %v461, 2
        %v463 = vmax.f32 %v461, %v462
        %v464 = vrot.slane %v463, 1
        %v465 = vmax.f32 %v463, %v464
        %v466 = vadd.f32 %v450, %v458
        %v467 = vadd.f32 %v451, %v465
        %v468 = vadd.s32 %v270, 128
        %v469 = vand.u32 %v270, 15
        %v470 = vand.u32 %v468, 15
        %vm471 = vcmp.ge.s32.totalorder %v270, 16
        %vm472 = vcmp.ge.s32.totalorder %v468, 16
        %vm473 = vcmp.lt.s32.totalorder %v270, 240
        %vm474 = vcmp.lt.s32.totalorder %v468, 240
        %vm475 = vcmp.ge.s32.totalorder %v469, 1
        %vm476 = vcmp.ge.s32.totalorder %v470, 1
        %vm477 = vcmp.le.s32.totalorder %v469, 14
        %vm478 = vcmp.le.s32.totalorder %v470, 14
        %s479 = sld [smem:[#allocation7]]
        %s480 = sld [smem:[#allocation7 + $0x1]]
        %s481 = sld [smem:[#allocation7 + $0x2]]
        %s482 = sld [smem:[#allocation7 + $0x80]]
        %s483 = sld [smem:[#allocation7 + $0x81]]
        %s484 = sld [smem:[#allocation7 + $0x82]]
        %s485 = sld [smem:[#allocation7 + $0x100]]
        %s486 = sld [smem:[#allocation7 + $0x101]]
        %s487 = sld [smem:[#allocation7 + $0x102]]
        %s488 = sld [smem:[#allocation2]]
        %v489 = vstv %s488
        %490 = vrot.lane.b32.xlu0 %v466, 17
        %v491 = vpop.permute.xlu0 %490
        %492 = vrot.lane.b32.xlu0 %v467, 17
        %v493 = vpop.permute.xlu0 %492
        %vm494 = vcmp.lt.s32.totalorder %v270, 17
        %v495 = vsel %vm494, %v491, %v493
        %v496 = vsel %vm494, %v493, %v491
        %vm497 = vmand %vm471, %vm475
        %vm498 = vmand %vm472, %vm476
        %v499 = vsel %vm497, %v496, 0.0
        %v500 = vsel %vm498, %v495, 0.0
        %v501 = vstv %s479
        %v502 = vmul.f32 %v501, %v499
        %v503 = vmul.f32 %v501, %v500
        %v504 = vadd.f32 %v489, %v502
        %v505 = vadd.f32 %v489, %v503
        %506 = vrot.lane.b32.xlu0 %v466, 16
        %v507 = vpop.permute.xlu0 %506
        %508 = vrot.lane.b32.xlu0 %v467, 16
        %v509 = vpop.permute.xlu0 %508
        %vm510 = vcmp.lt.s32.totalorder %v270, 16
        %v511 = vsel %vm510, %v507, %v509
        %v512 = vsel %vm510, %v509, %v507
        %v513 = vsel %vm471, %v512, 0.0
        %v514 = vsel %vm472, %v511, 0.0
        %v515 = vstv %s480
        %v516 = vmul.f32 %v515, %v513
        %v517 = vmul.f32 %v515, %v514
        %v518 = vadd.f32 %v504, %v516
        %v519 = vadd.f32 %v505, %v517
        %520 = vrot.lane.b32.xlu0 %v466, 15
        %v521 = vpop.permute.xlu0 %520
        %522 = vrot.lane.b32.xlu0 %v467, 15
        %v523 = vpop.permute.xlu0 %522
        %vm524 = vcmp.lt.s32.totalorder %v270, 15
        %v525 = vsel %vm524, %v521, %v523
        %v526 = vsel %vm524, %v523, %v521
        %vm527 = vmand %vm471, %vm477
        %vm528 = vmand %vm472, %vm478
        %v529 = vsel %vm527, %v526, 0.0
        %v530 = vsel %vm528, %v525, 0.0
        %v531 = vstv %s481
        %v532 = vmul.f32 %v531, %v529
        %v533 = vmul.f32 %v531, %v530
        %v534 = vadd.f32 %v518, %v532
        %v535 = vadd.f32 %v519, %v533
        %536 = vrot.lane.b32.xlu0 %v466, 1
        %v537 = vpop.permute.xlu0 %536
        %538 = vrot.lane.b32.xlu0 %v467, 1
        %v539 = vpop.permute.xlu0 %538
        %vm540 = vcmp.lt.s32.totalorder %v270, 1
        %v541 = vsel %vm540, %v537, %v539
        %v542 = vsel %vm540, %v539, %v537
        %v543 = vsel %vm475, %v542, 0.0
        %v544 = vsel %vm476, %v541, 0.0
        %v545 = vstv %s482
        %v546 = vmul.f32 %v545, %v543
        %v547 = vmul.f32 %v545, %v544
        %v548 = vadd.f32 %v534, %v546
        %v549 = vadd.f32 %v535, %v547
        %v550 = vstv %s483
        %v551 = vmul.f32 %v550, %v466
        %v552 = vmul.f32 %v550, %v467
        %v553 = vadd.f32 %v548, %v551
        %v554 = vadd.f32 %v549, %v552
        %555 = vrot.lane.b32.xlu0 %v466, 127
        %v556 = vpop.permute.xlu0 %555
        %557 = vrot.lane.b32.xlu0 %v467, 127
        %v558 = vpop.permute.xlu0 %557
        %vm559 = vcmp.lt.s32.totalorder %v270, 127
        %v560 = vsel %vm559, %v556, %v558
        %v561 = vsel %vm559, %v558, %v556
        %v562 = vsel %vm477, %v560, 0.0
        %v563 = vsel %vm478, %v561, 0.0
        %v564 = vstv %s484
        %v565 = vmul.f32 %v564, %v562
        %v566 = vmul.f32 %v564, %v563
        %v567 = vadd.f32 %v553, %v565
        %v568 = vadd.f32 %v554, %v566
        %569 = vrot.lane.b32.xlu0 %v466, 113
        %v570 = vpop.permute.xlu0 %569
        %571 = vrot.lane.b32.xlu0 %v467, 113
        %v572 = vpop.permute.xlu0 %571
        %vm573 = vcmp.lt.s32.totalorder %v270, 113
        %v574 = vsel %vm573, %v570, %v572
        %v575 = vsel %vm573, %v572, %v570
        %vm576 = vmand %vm473, %vm475
        %vm577 = vmand %vm474, %vm476
        %v578 = vsel %vm576, %v574, 0.0
        %v579 = vsel %vm577, %v575, 0.0
        %v580 = vstv %s485
        %v581 = vmul.f32 %v580, %v578
        %v582 = vmul.f32 %v580, %v579
        %v583 = vadd.f32 %v567, %v581
        %v584 = vadd.f32 %v568, %v582
        %585 = vrot.lane.b32.xlu0 %v466, 112
        %v586 = vpop.permute.xlu0 %585
        %587 = vrot.lane.b32.xlu0 %v467, 112
        %v588 = vpop.permute.xlu0 %587
        %vm589 = vcmp.lt.s32.totalorder %v270, 112
        %v590 = vsel %vm589, %v586, %v588
        %v591 = vsel %vm589, %v588, %v586
        %v592 = vsel %vm473, %v590, 0.0
        %v593 = vsel %vm474, %v591, 0.0
        %v594 = vstv %s486
        %v595 = vmul.f32 %v594, %v592
        %v596 = vmul.f32 %v594, %v593
        %v597 = vadd.f32 %v583, %v595
        %v598 = vadd.f32 %v584, %v596
        %599 = vrot.lane.b32.xlu0 %v466, 111
        %v600 = vpop.permute.xlu0 %599
        %601 = vrot.lane.b32.xlu0 %v467, 111
        %v602 = vpop.permute.xlu0 %601
        %vm603 = vcmp.lt.s32.totalorder %v270, 111
        %v604 = vsel %vm603, %v600, %v602
        %v605 = vsel %vm603, %v602, %v600
        %vm606 = vmand %vm473, %vm477
        %vm607 = vmand %vm474, %vm478
        %v608 = vsel %vm606, %v604, 0.0
        %v609 = vsel %vm607, %v605, 0.0
        %v610 = vstv %s487
        %v611 = vmul.f32 %v610, %v608
        %v612 = vmul.f32 %v610, %v609
        %v613 = vadd.f32 %v597, %v611
        %v614 = vadd.f32 %v598, %v612
        %v615 = vxor.u32 %v613, 2147483648
        %v616 = vxor.u32 %v614, 2147483648
        %v617 = vmul.f32 %v615, 1.442695
        %v618 = vpow.pop %v617
        %v619 = vmul.f32 %v616, 1.442695
        %v620 = vpow.pop %v619
        %v621 = vadd.f32 %v618, 1.0
        %v622 = vadd.f32 %v620, 1.0
        %v623 = vrcp.pop %v621
        %v624 = vmul.f32 1.0, %v623
        %v625 = vrcp.pop %v622
        %v626 = vmul.f32 1.0, %v625
        %v627 = vlaneseq
        %v628 = vshrl.u32 %v627, 7
        %v629 = vsub.s32 0, %v628
        %v630 = vrot.slane %v436, %v629
        %632 = vbcast.lane.b32.xlu0 %v630, 256
        %v633 = vpop.permute.xlu0 %632
        %v634 = vlaneseq
        %v635 = vshrl.u32 %v634, 7
        %v636 = vsub.s32 0, %v635
        %v637 = vrot.slane %v624, %v636
        %v638 = vlaneseq
        %v639 = vshrl.u32 %v638, 7
        %v640 = vsub.s32 0, %v639
        %v641 = vrot.slane %v626, %v640
        %v642 = vadd.f32 %v633, %v637
        %v643 = vadd.f32 %v633, %v641
        %v646 = vcombine.low %v642, %v643
        %v648 = vmul.f32 %v256, %v646
        %649 = vst [vmem:[%s255] sm:$0xff] %v648
        %s650 = sand.u32 %s142, 1
        %s651 = scalar_lea.sflag [#allocation5], %s650
        %s652 = sand.u32 %s142, 1
        %s653 = smul.addr %s652, 8
        %s654 = scalar_lea.vmem [#allocation8], %s653
        // Predicated region
        $region49: #{tpu_custom_call.1} parent=39 // pred_check
          %p655 = pneg %p152
        $region50: #{tpu_custom_call.1} parent=39 // pred_check_branch
          %657 = sbr.rel (%p655) target = $region52
        $region51: #{tpu_custom_call.1} parent=39 // pred_region
          %s659 = ssub.s32 128, 128
          %660 = vsyncadd %s651, %s659
          %s661 = smul.addr %s24, 2
          %s662 = smul.addr %s661, 64
          %s663 = scalar_lea.hbm %s5, %s662
          %s665 = sshll.u32 %s654, 4
          %s666 = int_to_ptr.vmem [resolvable:$true] %s665
          %668 = dma.vmem_to_hbm [thread:$0]  %s666, 128, %s663, %s651
        $region52: #{tpu_custom_call.1} parent=39 // pred_fallthru
          _
      $region40: #{tpu_custom_call.1} parent=5 // pred_fallthru
        _
      %p669 = scmp.le.s32.totalorder 2, %s19
      // Predicated region
      $region53: #{tpu_custom_call.1} parent=5 // pred_check
        %p670 = pneg %p669
      $region54: #{tpu_custom_call.1} parent=5 // pred_check_branch
        %672 = sbr.rel (%p670) target = $region56
      $region55: #{tpu_custom_call.1} parent=5 // pred_region
        %s673 = ssub.s32 %s19, 2
        // Predicated region
        $region57: #{tpu_custom_call.1} parent=55 // pred_check
          %p674 = pneg %p158
        $region58: #{tpu_custom_call.1} parent=55 // pred_check_branch
          %676 = sbr.rel (%p674) target = $region60
        $region59: #{tpu_custom_call.1} parent=55 // pred_region
          %s677 = sand.u32 %s143, 1
          %s678 = scalar_lea.sflag [#allocation5], %s677
          %s679 = sand.u32 %s143, 1
          %s680 = smul.addr %s679, 8
          %s681 = scalar_lea.vmem [#allocation8], %s680
          %682 = dma.done %s678, 128
        $region60: #{tpu_custom_call.1} parent=55 // pred_fallthru
          _
      $region56: #{tpu_custom_call.1} parent=5 // pred_fallthru
        _
    $region6: #{tpu_custom_call.1} parent=1 // loop_footer
      %s23 = sadd.s32 1, %s19
    $region7: #{tpu_custom_call.1} parent=1 // loop_footer_branch
      %18 = sbr.rel target = $region3
    $region8: #{tpu_custom_call.1} parent=1 // loop_exit
      _
    %683 = vsyncpa [#allocation4], 1
    %s684 = scalar_lea.sflag [#allocation4], 1
    %685 = vsyncpa %s684, 1
    %686 = vsyncpa [#allocation5], 1
    %s687 = scalar_lea.sflag [#allocation5], 1
    %688 = vsyncpa %s687, 1
    %689 = vsyncpa [#allocation6], 1
    %s690 = scalar_lea.sflag [#allocation6], 1
    %691 = vsyncpa %s690, 1

</llo_original>
